<compile_context>
chip_gen: v5e
topology: v5e:2x2
jax: 0.10.0
libtpu: 0.0.40
codegen_flags: <defaults>
</compile_context>

<pallas_src>
import functools

import jax
import jax.numpy as jnp
import numpy as np
from jax.experimental import pallas as pl
from jax.experimental.pallas import tpu as pltpu


# ----------------------------- in-kernel helpers -----------------------------

def _shift_down(x, k):
    """result[:, i] = x[:, i + k] (zero fill at the end).  Static lane shift."""
    if k == 0:
        return x
    return jnp.concatenate(
        [x[:, k:], jnp.zeros((x.shape[0], k), x.dtype)], axis=1)


def _shift_up(x, k):
    """result[:, i] = x[:, i - k] (zero fill at the start).  Static lane shift."""
    if k == 0:
        return x
    return jnp.concatenate(
        [jnp.zeros((x.shape[0], k), x.dtype), x[:, :x.shape[1] - k]], axis=1)


def _res_block_kernel(x_ref, w1_ref, b1_ref, w2_ref, b2_ref, mask_ref, out_ref,
                      *, Wp, has_projection):
    """Fused conv1(3x3)+shift+ReLU -> conv2(3x3)+shift, + shortcut, add, ReLU.

    Layout: activations are (C, Hp*Wp) -- channels in sublanes (padded to x8), the whole
    zero-padded spatial grid flattened into lanes.  A 3x3 tap at (kh, kw) is a lane shift by
    kh*Wp + kw, so each conv is ONE matmul with K = 9*C (im2col from 9 shifted copies).
    """
    x = x_ref[0]                        # (Cin_p, L) bf16, loaded once per grid step
    mask = mask_ref[...]                # (1, L) f32, 1.0 at interior (valid) positions

    # ---- stage 1: conv1(3x3, s=1) [BN scale pre-folded] as one K=9*Cin_p matmul ----
    x_taps = [_shift_down(x, kh * Wp + kw) for kh in range(3) for kw in range(3)]
    z1 = jnp.dot(w1_ref[...], jnp.concatenate(x_taps, axis=0),
                 preferred_element_type=jnp.float32)             # (Cout_p, L) f32
    y1 = jnp.maximum(z1 + b1_ref[...], 0.0)

    # Re-pad in registers: h(h, w) sits at padded coord (h+1, w+1) => lane shift by Wp+1; the
    # interior mask zeroes the 1-px halo and the cross-row conv garbage.  The intermediate
    # activation never touches HBM and no scratch zero-fill is needed.
    hpad = (_shift_up(y1, Wp + 1) * mask).astype(jnp.bfloat16)   # (Cout_p, L) bf16

    # ---- stage 2: conv2(3x3, s=1) [+ projection shortcut folded into the same matmul] ----
    h_taps = [_shift_down(hpad, kh * Wp + kw) for kh in range(3) for kw in range(3)]
    x_center = x_taps[4]                # x at the output grid positions (shift by Wp+1)
    if has_projection:
        rhs = jnp.concatenate(h_taps + [x_center], axis=0)       # K = 9*Cout_p + Cin_p
    else:
        rhs = jnp.concatenate(h_taps, axis=0)                    # K = 9*Cout_p
    z2 = jnp.dot(w2_ref[...], rhs, preferred_element_type=jnp.float32) + b2_ref[...]

    if not has_projection:
        z2 = z2 + x_center.astype(jnp.float32)                   # identity shortcut

    # residual add already applied; ReLU and lane-dense bf16 store.
    out_ref[0] = jnp.maximum(z2, 0.0).astype(out_ref.dtype)


# ------------------------------ host wrappers ------------------------------

def _fold_bn(gamma, beta, mean, var, eps=1e-5):
    scale = gamma / jnp.sqrt(var + eps)
    shift = beta - mean * scale
    return scale.astype(jnp.float32), shift.astype(jnp.float32)


def _round_up(n, m):
    return (n + m - 1) // m * m


def _stack_conv_weight(w_hwio, scale, cin_p, cout_p):
    """(3,3,Cin,Cout) * scale -> (Cout_p, 9*Cin_p) bf16, K ordered (kh, kw, cin)."""
    cin, cout = w_hwio.shape[2], w_hwio.shape[3]
    w = w_hwio * scale[None, None, None, :]
    w = jnp.transpose(w, (3, 0, 1, 2))                           # (Cout, 3, 3, Cin)
    w = jnp.pad(w, ((0, cout_p - cout), (0, 0), (0, 0), (0, cin_p - cin)))
    return w.reshape(cout_p, 9 * cin_p).astype(jnp.bfloat16)


def residual_block_forward(x_nchw, params, stride=1):
    """Pallas forward of ResidualBlock (eval-mode BN).  x_nchw: (N, Cin, H, W) float32."""
    if stride != 1:
        # TODO(synk): stride>1 needs lane-subsampled output gathers in the flattened layout;
        # fall back to the XLA reference path instead of shipping an untested strided kernel.
        return _reference_forward(x_nchw, params, stride=stride)

    N, Cin, H, W = x_nchw.shape
    Cout = params["w1"].shape[-1]
    Ho, Wo = H, W
    Hp, Wp = H + 2, W + 2
    L = Hp * Wp
    Cin_p, Cout_p = _round_up(Cin, 8), _round_up(Cout, 8)        # sublane-friendly channel pad
    has_projection = Cin != Cout

    # Fold eval-mode BN: scale into the conv/projection weights, shift stays as a bias.
    s1, b1 = _fold_bn(params["g1"], params["be1"], params["m1"], params["v1"])
    s2, b2 = _fold_bn(params["g2"], params["be2"], params["m2"], params["v2"])
    w1 = _stack_conv_weight(params["w1"], s1, Cin_p, Cout_p)     # (Cout_p, 9*Cin_p)
    w2 = _stack_conv_weight(params["w2"], s2, Cout_p, Cout_p)    # (Cout_p, 9*Cout_p)
    b1 = jnp.pad(b1, (0, Cout_p - Cout))
    b2 = jnp.pad(b2, (0, Cout_p - Cout))
    if has_projection:
        ssc, bsc = _fold_bn(params["gsc"], params["besc"], params["msc"], params["vsc"])
        wsc = (params["wsc"] * ssc[None, :]).T                   # (Cout, Cin), scale folded
        wsc = jnp.pad(wsc, ((0, Cout_p - Cout), (0, Cin_p - Cin))).astype(jnp.bfloat16)
        w2 = jnp.concatenate([w2, wsc], axis=1)                  # shortcut folded into conv2 dot
        b2 = b2 + jnp.pad(bsc, (0, Cout_p - Cout))               # shortcut BN shift folded in
    b1 = b1.reshape(Cout_p, 1)
    b2 = b2.reshape(Cout_p, 1)

    # Input: NCHW -> pad channels to x8, zero-pad spatial by 1, flatten spatial into lanes.
    xpad = jnp.pad(x_nchw, ((0, 0), (0, Cin_p - Cin), (1, 1), (1, 1)))
    x_flat = xpad.reshape(N, Cin_p, L).astype(jnp.bfloat16)

    # Interior mask on the flattened padded grid (1.0 where the re-padded h is non-zero).
    m = np.zeros((Hp, Wp), np.float32)
    m[1:Ho + 1, 1:Wo + 1] = 1.0
    mask = jnp.asarray(m.reshape(1, L))

    kernel = functools.partial(_res_block_kernel, Wp=Wp, has_projection=has_projection)

    # TODO(synk): for large spatial extents, add an output-row grid axis (2-row halo) so each
    #             core gets >=4-8 pipeline steps; at 16x16 the batch axis is the only useful one.
    # TODO(synk): on v7x, single-buffer the grid-invariant weight operands (pl.Buffered(1))
    #             once pipeline_mode is plumbed through pallas_call; negligible at these sizes.
    out = pl.pallas_call(
        kernel,
        out_shape=jax.ShapeDtypeStruct((N, Cout_p, L), jnp.bfloat16),
        grid=(N,),
        in_specs=[
            pl.BlockSpec((1, Cin_p, L), lambda n: (n, 0, 0)),
            pl.BlockSpec(w1.shape, lambda n: (0, 0)),
            pl.BlockSpec((Cout_p, 1), lambda n: (0, 0)),
            pl.BlockSpec(w2.shape, lambda n: (0, 0)),
            pl.BlockSpec((Cout_p, 1), lambda n: (0, 0)),
            pl.BlockSpec((1, L), lambda n: (0, 0)),
        ],
        out_specs=pl.BlockSpec((1, Cout_p, L), lambda n: (n, 0, 0)),
        compiler_params=pltpu.CompilerParams(
            dimension_semantics=("parallel",),
            vmem_limit_bytes=48 * 1024 * 1024),
    )(x_flat, w1, b1, w2, b2, mask)

    # Lane-dense bf16 slab -> NCHW: drop halo rows/cols + channel padding, cast to f32.
    out = out.reshape(N, Cout_p, Hp, Wp)[:, :Cout, :Ho, :Wo]
    return out.astype(jnp.float32)


def _reference_forward(x_nchw, params, stride=1):
    """Pure-JAX f32 reference (lax conv) for verification."""
    x = jnp.transpose(x_nchw, (0, 2, 3, 1)).astype(jnp.float32)

    def conv(inp, w, s, pad):
        return jax.lax.conv_general_dilated(
            inp, w, (s, s), ((pad, pad), (pad, pad)),
            dimension_numbers=("NHWC", "HWIO", "NHWC"))

    def bn(inp, g, be, m, v, eps=1e-5):
        return (inp - m) / jnp.sqrt(v + eps) * g + be

    h = jax.nn.relu(bn(conv(x, params["w1"], stride, 1),
                       params["g1"], params["be1"], params["m1"], params["v1"]))
    left = bn(conv(h, params["w2"], 1, 1),
              params["g2"], params["be2"], params["m2"], params["v2"])
    Cin, Cout = params["w1"].shape[2], params["w1"].shape[3]
    if stride != 1 or Cin != Cout:
        sc = bn(conv(x, params["wsc"].reshape(1, 1, Cin, Cout), stride, 0),
                params["gsc"], params["besc"], params["msc"], params["vsc"])
    else:
        sc = x
    out = jax.nn.relu(left + sc)
    return jnp.transpose(out, (0, 3, 1, 2))


def make_params(key, cin, cout):
    ks = jax.random.split(key, 15)
    return {
        "w1":  0.1 * jax.random.normal(ks[0], (3, 3, cin, cout), jnp.float32),
        "g1":  1.0 + 0.1 * jax.random.normal(ks[1], (cout,), jnp.float32),
        "be1": 0.1 * jax.random.normal(ks[2], (cout,), jnp.float32),
        "m1":  0.1 * jax.random.normal(ks[3], (cout,), jnp.float32),
        "v1":  1.0 + 0.1 * jnp.abs(jax.random.normal(ks[4], (cout,), jnp.float32)),
        "w2":  0.1 * jax.random.normal(ks[5], (3, 3, cout, cout), jnp.float32),
        "g2":  1.0 + 0.1 * jax.random.normal(ks[6], (cout,), jnp.float32),
        "be2": 0.1 * jax.random.normal(ks[7], (cout,), jnp.float32),
        "m2":  0.1 * jax.random.normal(ks[8], (cout,), jnp.float32),
        "v2":  1.0 + 0.1 * jnp.abs(jax.random.normal(ks[9], (cout,), jnp.float32)),
        "wsc": 0.1 * jax.random.normal(ks[10], (cin, cout), jnp.float32),
        "gsc": 1.0 + 0.1 * jax.random.normal(ks[11], (cout,), jnp.float32),
        "besc": 0.1 * jax.random.normal(ks[12], (cout,), jnp.float32),
        "msc": 0.1 * jax.random.normal(ks[13], (cout,), jnp.float32),
        "vsc": 1.0 + 0.1 * jnp.abs(jax.random.normal(ks[14], (cout,), jnp.float32)),
    }


if __name__ == "__main__":
    keys = jax.random.split(jax.random.PRNGKey(0), 4)

    # Tolerances: kernel uses bf16 MXU operands with f32 accumulation; reference is pure f32.
    RTOL = ATOL = 5e-2

    # ---- case 1: projection shortcut (Cin != Cout), stride=1 ----
    N, Cin, H, W, Cout, stride = 2, 4, 16, 16, 8, 1
    x = jax.random.normal(keys[0], (N, Cin, H, W), jnp.float32)
    params = make_params(keys[1], Cin, Cout)
    out = jax.block_until_ready(residual_block_forward(x, params, stride=stride))
    ref = jax.block_until_ready(_reference_forward(x, params, stride=stride))
    np.testing.assert_allclose(np.asarray(out), np.asarray(ref), rtol=RTOL, atol=ATOL)
    assert out.shape == (N, Cout, H // stride, W // stride)

    # ---- case 2: identity shortcut (Cin == Cout, stride=1) -> exercises the bypass path ----
    C2 = 8
    x2 = jax.random.normal(keys[2], (N, C2, H, W), jnp.float32)
    params2 = make_params(keys[3], C2, C2)
    out2 = jax.block_until_ready(residual_block_forward(x2, params2, stride=1))
    ref2 = jax.block_until_ready(_reference_forward(x2, params2, stride=1))
    np.testing.assert_allclose(np.asarray(out2), np.asarray(ref2), rtol=RTOL, atol=ATOL)
    assert out2.shape == (N, C2, H, W)

    print("KERNEL_OK")
</pallas_src>

<mosaic_0001>
module attributes {stable_mosaic.version = 11 : i64} {
  func.func @_res_block_kernel(%arg0: i32, %arg1: memref<1x8x324xbf16, #tpu.memory_space<vmem>>, %arg2: memref<8x72xbf16, #tpu.memory_space<vmem>>, %arg3: memref<8x1xf32, #tpu.memory_space<vmem>>, %arg4: memref<8x80xbf16, #tpu.memory_space<vmem>>, %arg5: memref<8x1xf32, #tpu.memory_space<vmem>>, %arg6: memref<1x324xf32, #tpu.memory_space<vmem>>, %arg7: memref<1x8x324xbf16, #tpu.memory_space<vmem>>) attributes {dimension_semantics = [#tpu.dimension_semantics<parallel>], iteration_bounds = array<i64: 2>, scalar_prefetch = 0 : i64, scratch_operands = 0 : i64, tpu.core_type = #tpu.core_type<tc>, window_params = [{transform_indices = @transform_0, window_bounds = array<i64: 1, 8, 324>}, {pipeline_mode = #tpu.pipeline_mode<synchronous>, transform_indices = @transform_1, window_bounds = array<i64: 8, 72>}, {pipeline_mode = #tpu.pipeline_mode<synchronous>, transform_indices = @transform_2, window_bounds = array<i64: 8, 1>}, {pipeline_mode = #tpu.pipeline_mode<synchronous>, transform_indices = @transform_3, window_bounds = array<i64: 8, 80>}, {pipeline_mode = #tpu.pipeline_mode<synchronous>, transform_indices = @transform_4, window_bounds = array<i64: 8, 1>}, {pipeline_mode = #tpu.pipeline_mode<synchronous>, transform_indices = @transform_5, window_bounds = array<i64: 1, 324>}, {transform_indices = @transform_6, window_bounds = array<i64: 1, 8, 324>}]} {
    %c0 = arith.constant 0 : index
    %c0_0 = arith.constant 0 : index
    %c0_1 = arith.constant 0 : index
    %0 = vector.load %arg1[%c0, %c0_0, %c0_1] : memref<1x8x324xbf16, #tpu.memory_space<vmem>>, vector<1x8x324xbf16>
    %1 = vector.shape_cast %0 : vector<1x8x324xbf16> to vector<8x324xbf16>
    %c0_2 = arith.constant 0 : index
    %c0_3 = arith.constant 0 : index
    %2 = vector.load %arg6[%c0_2, %c0_3] : memref<1x324xf32, #tpu.memory_space<vmem>>, vector<1x324xf32>
    %3 = vector.extract_strided_slice %1 {offsets = [0, 1], sizes = [8, 323], strides = [1, 1]} : vector<8x324xbf16> to vector<8x323xbf16>
    %cst = arith.constant 0.000000e+00 : bf16
    %4 = vector.broadcast %cst : bf16 to vector<8x1xbf16>
    %5 = tpu.concatenate %3, %4 in 1 : vector<8x323xbf16>, vector<8x1xbf16> -> vector<8x324xbf16>
    %6 = vector.extract_strided_slice %1 {offsets = [0, 2], sizes = [8, 322], strides = [1, 1]} : vector<8x324xbf16> to vector<8x322xbf16>
    %cst_4 = arith.constant 0.000000e+00 : bf16
    %7 = vector.broadcast %cst_4 : bf16 to vector<8x2xbf16>
    %8 = tpu.concatenate %6, %7 in 1 : vector<8x322xbf16>, vector<8x2xbf16> -> vector<8x324xbf16>
    %9 = vector.extract_strided_slice %1 {offsets = [0, 18], sizes = [8, 306], strides = [1, 1]} : vector<8x324xbf16> to vector<8x306xbf16>
    %cst_5 = arith.constant 0.000000e+00 : bf16
    %10 = vector.broadcast %cst_5 : bf16 to vector<8x18xbf16>
    %11 = tpu.concatenate %9, %10 in 1 : vector<8x306xbf16>, vector<8x18xbf16> -> vector<8x324xbf16>
    %12 = vector.extract_strided_slice %1 {offsets = [0, 19], sizes = [8, 305], strides = [1, 1]} : vector<8x324xbf16> to vector<8x305xbf16>
    %cst_6 = arith.constant 0.000000e+00 : bf16
    %13 = vector.broadcast %cst_6 : bf16 to vector<8x19xbf16>
    %14 = tpu.concatenate %12, %13 in 1 : vector<8x305xbf16>, vector<8x19xbf16> -> vector<8x324xbf16>
    %15 = vector.extract_strided_slice %1 {offsets = [0, 20], sizes = [8, 304], strides = [1, 1]} : vector<8x324xbf16> to vector<8x304xbf16>
    %cst_7 = arith.constant 0.000000e+00 : bf16
    %16 = vector.broadcast %cst_7 : bf16 to vector<8x20xbf16>
    %17 = tpu.concatenate %15, %16 in 1 : vector<8x304xbf16>, vector<8x20xbf16> -> vector<8x324xbf16>
    %18 = vector.extract_strided_slice %1 {offsets = [0, 36], sizes = [8, 288], strides = [1, 1]} : vector<8x324xbf16> to vector<8x288xbf16>
    %cst_8 = arith.constant 0.000000e+00 : bf16
    %19 = vector.broadcast %cst_8 : bf16 to vector<8x36xbf16>
    %20 = tpu.concatenate %18, %19 in 1 : vector<8x288xbf16>, vector<8x36xbf16> -> vector<8x324xbf16>
    %21 = vector.extract_strided_slice %1 {offsets = [0, 37], sizes = [8, 287], strides = [1, 1]} : vector<8x324xbf16> to vector<8x287xbf16>
    %cst_9 = arith.constant 0.000000e+00 : bf16
    %22 = vector.broadcast %cst_9 : bf16 to vector<8x37xbf16>
    %23 = tpu.concatenate %21, %22 in 1 : vector<8x287xbf16>, vector<8x37xbf16> -> vector<8x324xbf16>
    %24 = vector.extract_strided_slice %1 {offsets = [0, 38], sizes = [8, 286], strides = [1, 1]} : vector<8x324xbf16> to vector<8x286xbf16>
    %cst_10 = arith.constant 0.000000e+00 : bf16
    %25 = vector.broadcast %cst_10 : bf16 to vector<8x38xbf16>
    %26 = tpu.concatenate %24, %25 in 1 : vector<8x286xbf16>, vector<8x38xbf16> -> vector<8x324xbf16>
    %c0_11 = arith.constant 0 : index
    %c0_12 = arith.constant 0 : index
    %27 = vector.load %arg2[%c0_11, %c0_12] : memref<8x72xbf16, #tpu.memory_space<vmem>>, vector<8x72xbf16>
    %28 = tpu.concatenate %1, %5, %8, %11, %14, %17, %20, %23, %26 in 0 : vector<8x324xbf16>, vector<8x324xbf16>, vector<8x324xbf16>, vector<8x324xbf16>, vector<8x324xbf16>, vector<8x324xbf16>, vector<8x324xbf16>, vector<8x324xbf16>, vector<8x324xbf16> -> vector<72x324xbf16>
    %cst_13 = arith.constant dense<0.000000e+00> : vector<8x324xf32>
    %29 = tpu.matmul %27, %28, %cst_13 {dimension_numbers = #tpu.dot_dimension_numbers<[1], [0], [0], [1], [0, 0, 1, 1], [], []>} : vector<8x72xbf16>, vector<72x324xbf16>, vector<8x324xf32> -> vector<8x324xf32>
    %c0_14 = arith.constant 0 : index
    %c0_15 = arith.constant 0 : index
    %30 = vector.load %arg3[%c0_14, %c0_15] : memref<8x1xf32, #tpu.memory_space<vmem>>, vector<8x1xf32>
    %31 = vector.broadcast %30 : vector<8x1xf32> to vector<8x324xf32>
    %32 = arith.addf %29, %31 : vector<8x324xf32>
    %cst_16 = arith.constant 0.000000e+00 : f32
    %33 = vector.broadcast %cst_16 : f32 to vector<8x324xf32>
    %34 = arith.maximumf %32, %33 : vector<8x324xf32>
    %cst_17 = arith.constant 0.000000e+00 : f32
    %35 = vector.broadcast %cst_17 : f32 to vector<8x19xf32>
    %36 = vector.extract_strided_slice %34 {offsets = [0, 0], sizes = [8, 305], strides = [1, 1]} : vector<8x324xf32> to vector<8x305xf32>
    %37 = tpu.concatenate %35, %36 in 1 : vector<8x19xf32>, vector<8x305xf32> -> vector<8x324xf32>
    %38 = vector.broadcast %2 : vector<1x324xf32> to vector<8x324xf32>
    %39 = arith.mulf %37, %38 : vector<8x324xf32>
    %40 = arith.truncf %39 : vector<8x324xf32> to vector<8x324xbf16>
    %41 = vector.extract_strided_slice %40 {offsets = [0, 1], sizes = [8, 323], strides = [1, 1]} : vector<8x324xbf16> to vector<8x323xbf16>
    %cst_18 = arith.constant 0.000000e+00 : bf16
    %42 = vector.broadcast %cst_18 : bf16 to vector<8x1xbf16>
    %43 = tpu.concatenate %41, %42 in 1 : vector<8x323xbf16>, vector<8x1xbf16> -> vector<8x324xbf16>
    %44 = vector.extract_strided_slice %40 {offsets = [0, 2], sizes = [8, 322], strides = [1, 1]} : vector<8x324xbf16> to vector<8x322xbf16>
    %cst_19 = arith.constant 0.000000e+00 : bf16
    %45 = vector.broadcast %cst_19 : bf16 to vector<8x2xbf16>
    %46 = tpu.concatenate %44, %45 in 1 : vector<8x322xbf16>, vector<8x2xbf16> -> vector<8x324xbf16>
    %47 = vector.extract_strided_slice %40 {offsets = [0, 18], sizes = [8, 306], strides = [1, 1]} : vector<8x324xbf16> to vector<8x306xbf16>
    %cst_20 = arith.constant 0.000000e+00 : bf16
    %48 = vector.broadcast %cst_20 : bf16 to vector<8x18xbf16>
    %49 = tpu.concatenate %47, %48 in 1 : vector<8x306xbf16>, vector<8x18xbf16> -> vector<8x324xbf16>
    %50 = vector.extract_strided_slice %40 {offsets = [0, 19], sizes = [8, 305], strides = [1, 1]} : vector<8x324xbf16> to vector<8x305xbf16>
    %cst_21 = arith.constant 0.000000e+00 : bf16
    %51 = vector.broadcast %cst_21 : bf16 to vector<8x19xbf16>
    %52 = tpu.concatenate %50, %51 in 1 : vector<8x305xbf16>, vector<8x19xbf16> -> vector<8x324xbf16>
    %53 = vector.extract_strided_slice %40 {offsets = [0, 20], sizes = [8, 304], strides = [1, 1]} : vector<8x324xbf16> to vector<8x304xbf16>
    %cst_22 = arith.constant 0.000000e+00 : bf16
    %54 = vector.broadcast %cst_22 : bf16 to vector<8x20xbf16>
    %55 = tpu.concatenate %53, %54 in 1 : vector<8x304xbf16>, vector<8x20xbf16> -> vector<8x324xbf16>
    %56 = vector.extract_strided_slice %40 {offsets = [0, 36], sizes = [8, 288], strides = [1, 1]} : vector<8x324xbf16> to vector<8x288xbf16>
    %cst_23 = arith.constant 0.000000e+00 : bf16
    %57 = vector.broadcast %cst_23 : bf16 to vector<8x36xbf16>
    %58 = tpu.concatenate %56, %57 in 1 : vector<8x288xbf16>, vector<8x36xbf16> -> vector<8x324xbf16>
    %59 = vector.extract_strided_slice %40 {offsets = [0, 37], sizes = [8, 287], strides = [1, 1]} : vector<8x324xbf16> to vector<8x287xbf16>
    %cst_24 = arith.constant 0.000000e+00 : bf16
    %60 = vector.broadcast %cst_24 : bf16 to vector<8x37xbf16>
    %61 = tpu.concatenate %59, %60 in 1 : vector<8x287xbf16>, vector<8x37xbf16> -> vector<8x324xbf16>
    %62 = vector.extract_strided_slice %40 {offsets = [0, 38], sizes = [8, 286], strides = [1, 1]} : vector<8x324xbf16> to vector<8x286xbf16>
    %cst_25 = arith.constant 0.000000e+00 : bf16
    %63 = vector.broadcast %cst_25 : bf16 to vector<8x38xbf16>
    %64 = tpu.concatenate %62, %63 in 1 : vector<8x286xbf16>, vector<8x38xbf16> -> vector<8x324xbf16>
    %65 = tpu.concatenate %40, %43, %46, %49, %52, %55, %58, %61, %64, %14 in 0 : vector<8x324xbf16>, vector<8x324xbf16>, vector<8x324xbf16>, vector<8x324xbf16>, vector<8x324xbf16>, vector<8x324xbf16>, vector<8x324xbf16>, vector<8x324xbf16>, vector<8x324xbf16>, vector<8x324xbf16> -> vector<80x324xbf16>
    %c0_26 = arith.constant 0 : index
    %c0_27 = arith.constant 0 : index
    %66 = vector.load %arg4[%c0_26, %c0_27] : memref<8x80xbf16, #tpu.memory_space<vmem>>, vector<8x80xbf16>
    %cst_28 = arith.constant dense<0.000000e+00> : vector<8x324xf32>
    %67 = tpu.matmul %66, %65, %cst_28 {dimension_numbers = #tpu.dot_dimension_numbers<[1], [0], [0], [1], [0, 0, 1, 1], [], []>} : vector<8x80xbf16>, vector<80x324xbf16>, vector<8x324xf32> -> vector<8x324xf32>
    %c0_29 = arith.constant 0 : index
    %c0_30 = arith.constant 0 : index
    %68 = vector.load %arg5[%c0_29, %c0_30] : memref<8x1xf32, #tpu.memory_space<vmem>>, vector<8x1xf32>
    %69 = vector.broadcast %68 : vector<8x1xf32> to vector<8x324xf32>
    %70 = arith.addf %67, %69 : vector<8x324xf32>
    %cst_31 = arith.constant 0.000000e+00 : f32
    %71 = vector.broadcast %cst_31 : f32 to vector<8x324xf32>
    %72 = arith.maximumf %70, %71 : vector<8x324xf32>
    %73 = arith.truncf %72 : vector<8x324xf32> to vector<8x324xbf16>
    %c0_32 = arith.constant 0 : index
    %c0_33 = arith.constant 0 : index
    %c0_34 = arith.constant 0 : index
    %74 = vector.load %arg7[%c0_32, %c0_33, %c0_34] : memref<1x8x324xbf16, #tpu.memory_space<vmem>>, vector<1x8x324xbf16>
    %75 = vector.shape_cast %74 : vector<1x8x324xbf16> to vector<8x324xbf16>
    %76 = vector.shape_cast %73 : vector<8x324xbf16> to vector<1x8x324xbf16>
    tpu.vector_store %arg7[%c0_32, %c0_33, %c0_34], %76 {strides = array<i32>} : memref<1x8x324xbf16, #tpu.memory_space<vmem>>, vector<1x8x324xbf16>,
    return
  }
  func.func @transform_0(%arg0: i32) -> (i32, i32, i32) {
    %c0_i32 = arith.constant 0 : i32
    %c0_i32_0 = arith.constant 0 : i32
    %c0_i32_1 = arith.constant 0 : i32
    return %arg0, %c0_i32, %c0_i32_0 : i32, i32, i32
  }
  func.func @transform_1(%arg0: i32) -> (i32, i32) {
    %c0_i32 = arith.constant 0 : i32
    %c0_i32_0 = arith.constant 0 : i32
    %c0_i32_1 = arith.constant 0 : i32
    return %c0_i32, %c0_i32_0 : i32, i32
  }
  func.func @transform_2(%arg0: i32) -> (i32, i32) {
    %c0_i32 = arith.constant 0 : i32
    %c0_i32_0 = arith.constant 0 : i32
    %c0_i32_1 = arith.constant 0 : i32
    return %c0_i32, %c0_i32_0 : i32, i32
  }
  func.func @transform_3(%arg0: i32) -> (i32, i32) {
    %c0_i32 = arith.constant 0 : i32
    %c0_i32_0 = arith.constant 0 : i32
    %c0_i32_1 = arith.constant 0 : i32
    return %c0_i32, %c0_i32_0 : i32, i32
  }
  func.func @transform_4(%arg0: i32) -> (i32, i32) {
    %c0_i32 = arith.constant 0 : i32
    %c0_i32_0 = arith.constant 0 : i32
    %c0_i32_1 = arith.constant 0 : i32
    return %c0_i32, %c0_i32_0 : i32, i32
  }
  func.func @transform_5(%arg0: i32) -> (i32, i32) {
    %c0_i32 = arith.constant 0 : i32
    %c0_i32_0 = arith.constant 0 : i32
    %c0_i32_1 = arith.constant 0 : i32
    return %c0_i32, %c0_i32_0 : i32, i32
  }
  func.func @transform_6(%arg0: i32) -> (i32, i32, i32) {
    %c0_i32 = arith.constant 0 : i32
    %c0_i32_0 = arith.constant 0 : i32
    %c0_i32_1 = arith.constant 0 : i32
    return %arg0, %c0_i32, %c0_i32_0 : i32, i32, i32
  }
}

</mosaic_0001>

<llo_original>
// kernel: tpu_custom_call.1
$region0: #{tpu_custom_call.1}
  #allocation0 [shape = 'u32[]', space=smem, size = 0x4, offset = 0x4, fixed_abs, tag = 'smem constant byte address 0x4 - core index']
  #allocation1 [shape = 'u32[72,128]{1,0:T(1,128)}', space=vmem, size = 0x9000, scoped, tag = 'internal scratch']
  %s0 = inlined_call_operand.hbm [shape: bf16[2,8,324], index: 0, kind: input, shape index: {}]
  %s1 = inlined_call_operand.vmem [shape: bf16[8,72], index: 1, kind: input, shape index: {}]
  %s2 = inlined_call_operand.vmem [shape: f32[8,1], index: 2, kind: input, shape index: {}]
  %s3 = inlined_call_operand.vmem [shape: bf16[8,80], index: 3, kind: input, shape index: {}]
  %s4 = inlined_call_operand.vmem [shape: f32[8,1], index: 4, kind: input, shape index: {}]
  %s5 = inlined_call_operand.vmem [shape: f32[1,324], index: 5, kind: input, shape index: {}]
  %s6 = inlined_call_operand.hbm [shape: bf16[2,8,324], index: 6, kind: output, shape index: {}]
  %s7 = sld [smem:[#allocation0]]
  $region61: #{tpu_custom_call.1} parent=0
    _
  %s9 = ssub.s32 1, %s7
  %s10 = scalar_select 0, %s9, %s7
  $region1: #{tpu_custom_call.1} parent=0
    #allocation2 [shape = 'u8[12288]{0}', space=vmem, size = 0x3000, scoped, tag = 'input window, operand 0']
    #allocation3 [shape = 's32[2]{0}', space=sflag, size = 0x8, scoped, tag = 'scoped memory for tpu_custom_call.1']
    #allocation4 [shape = 's32[2]{0}', space=sflag, size = 0x8, scoped, tag = 'scoped memory for tpu_custom_call.1']
    #allocation5 [shape = 'u8[12288]{0}', space=vmem, size = 0x3000, scoped, tag = 'output window, operand 0']
    %11 = vsyncpa [#allocation3], 0
    %s12 = scalar_lea.sflag [#allocation3], 1
    %13 = vsyncpa %s12, 0
    %14 = vsyncpa [#allocation4], 0
    %s15 = scalar_lea.sflag [#allocation4], 1
    %16 = vsyncpa %s15, 0
    loop: start=0, step=1, limit=4
    $region2: #{tpu_custom_call.1} parent=1 // loop_pre_header
      _
    $region3: #{tpu_custom_call.1} parent=1 // loop_header
      %s18 = sphi 0, %s22
      %p19 = scmp.ge.s32.totalorder %s18, 4
      %s28 = sphi 0, %s30
      %s31 = sphi 0, %s28
      %s32 = sphi 0, %s31
      %s48 = sphi 0, %s32
      %s52 = sphi 0, %s52
      %s54 = sphi 0, %s52
      %s55 = sphi 0, %s54
      %s69 = sphi 0, %s55
      %s73 = sphi 0, %s73
      %s75 = sphi 0, %s73
      %s76 = sphi 0, %s75
      %s90 = sphi 0, %s76
      %s94 = sphi 0, %s94
      %s96 = sphi 0, %s94
      %s97 = sphi 0, %s96
      %s111 = sphi 0, %s97
      %s115 = sphi 0, %s115
      %s117 = sphi 0, %s115
      %s118 = sphi 0, %s117
      %s132 = sphi 0, %s118
      %s136 = sphi 0, %s136
      %s138 = sphi 0, %s136
      %s139 = sphi 0, %s138
      %s153 = sphi 0, %s139
      %s159 = sphi 0, %s161
      %s162 = sphi 0, %s159
      %s163 = sphi 0, %s162
      %s179 = sphi 0, %s163
    $region4: #{tpu_custom_call.1} parent=1 // loop_header_branch
      %21 = sbr.rel (%p19) target = $region8
    $region5: #{tpu_custom_call.1} parent=1 // loop_body
      %s23 = ssub.s32 %s18, 1
      %s24 = ssub.s32 %s18, 2
      %s25 = sadd.s32 %s18, 1
      %s26 = ssub.s32 %s18, %s25
      %p27 = scmp.eq.s32.totalorder %s26, 0
      %s29 = sadd.s32 %s28, 1
      %s30 = scalar_select %p27, %s28, %s29
      %p33 = pneg %p27
      %p34 = scmp.eq.s32.totalorder %s18, 1
      %p35 = por %p33, %p34
      %p36 = scmp.ne.s32.totalorder %s28, %s31
      %p37 = scmp.eq.s32.totalorder %s18, 0
      %p38 = por %p36, %p37
      %p39 = scmp.ne.s32.totalorder %s28, %s31
      %p40 = scmp.eq.s32.totalorder %s23, 1
      %p41 = por %p39, %p40
      %p42 = scmp.ne.s32.totalorder %s31, %s32
      %p43 = scmp.eq.s32.totalorder %s23, 0
      %p44 = por %p42, %p43
      %p45 = scmp.ne.s32.totalorder %s31, %s32
      %p46 = scmp.eq.s32.totalorder %s24, 1
      %p47 = por %p45, %p46
      %p49 = scmp.ne.s32.totalorder %s32, %s48
      %p50 = scmp.eq.s32.totalorder %s24, 0
      %p51 = por %p49, %p50
      %s53 = sadd.s32 %s52, 1
      %p56 = scmp.eq.s32.totalorder %s18, 1
      %p57 = scmp.ne.s32.totalorder %s52, %s54
      %p58 = scmp.eq.s32.totalorder %s18, 0
      %p59 = por %p57, %p58
      %p60 = scmp.ne.s32.totalorder %s52, %s54
      %p61 = scmp.eq.s32.totalorder %s23, 1
      %p62 = por %p60, %p61
      %p63 = scmp.ne.s32.totalorder %s54, %s55
      %p64 = scmp.eq.s32.totalorder %s23, 0
      %p65 = por %p63, %p64
      %p66 = scmp.ne.s32.totalorder %s54, %s55
      %p67 = scmp.eq.s32.totalorder %s24, 1
      %p68 = por %p66, %p67
      %p70 = scmp.ne.s32.totalorder %s55, %s69
      %p71 = scmp.eq.s32.totalorder %s24, 0
      %p72 = por %p70, %p71
      %s74 = sadd.s32 %s73, 1
      %p77 = scmp.eq.s32.totalorder %s18, 1
      %p78 = scmp.ne.s32.totalorder %s73, %s75
      %p79 = scmp.eq.s32.totalorder %s18, 0
      %p80 = por %p78, %p79
      %p81 = scmp.ne.s32.totalorder %s73, %s75
      %p82 = scmp.eq.s32.totalorder %s23, 1
      %p83 = por %p81, %p82
      %p84 = scmp.ne.s32.totalorder %s75, %s76
      %p85 = scmp.eq.s32.totalorder %s23, 0
      %p86 = por %p84, %p85
      %p87 = scmp.ne.s32.totalorder %s75, %s76
      %p88 = scmp.eq.s32.totalorder %s24, 1
      %p89 = por %p87, %p88
      %p91 = scmp.ne.s32.totalorder %s76, %s90
      %p92 = scmp.eq.s32.totalorder %s24, 0
      %p93 = por %p91, %p92
      %s95 = sadd.s32 %s94, 1
      %p98 = scmp.eq.s32.totalorder %s18, 1
      %p99 = scmp.ne.s32.totalorder %s94, %s96
      %p100 = scmp.eq.s32.totalorder %s18, 0
      %p101 = por %p99, %p100
      %p102 = scmp.ne.s32.totalorder %s94, %s96
      %p103 = scmp.eq.s32.totalorder %s23, 1
      %p104 = por %p102, %p103
      %p105 = scmp.ne.s32.totalorder %s96, %s97
      %p106 = scmp.eq.s32.totalorder %s23, 0
      %p107 = por %p105, %p106
      %p108 = scmp.ne.s32.totalorder %s96, %s97
      %p109 = scmp.eq.s32.totalorder %s24, 1
      %p110 = por %p108, %p109
      %p112 = scmp.ne.s32.totalorder %s97, %s111
      %p113 = scmp.eq.s32.totalorder %s24, 0
      %p114 = por %p112, %p113
      %s116 = sadd.s32 %s115, 1
      %p119 = scmp.eq.s32.totalorder %s18, 1
      %p120 = scmp.ne.s32.totalorder %s115, %s117
      %p121 = scmp.eq.s32.totalorder %s18, 0
      %p122 = por %p120, %p121
      %p123 = scmp.ne.s32.totalorder %s115, %s117
      %p124 = scmp.eq.s32.totalorder %s23, 1
      %p125 = por %p123, %p124
      %p126 = scmp.ne.s32.totalorder %s117, %s118
      %p127 = scmp.eq.s32.totalorder %s23, 0
      %p128 = por %p126, %p127
      %p129 = scmp.ne.s32.totalorder %s117, %s118
      %p130 = scmp.eq.s32.totalorder %s24, 1
      %p131 = por %p129, %p130
      %p133 = scmp.ne.s32.totalorder %s118, %s132
      %p134 = scmp.eq.s32.totalorder %s24, 0
      %p135 = por %p133, %p134
      %s137 = sadd.s32 %s136, 1
      %p140 = scmp.eq.s32.totalorder %s18, 1
      %p141 = scmp.ne.s32.totalorder %s136, %s138
      %p142 = scmp.eq.s32.totalorder %s18, 0
      %p143 = por %p141, %p142
      %p144 = scmp.ne.s32.totalorder %s136, %s138
      %p145 = scmp.eq.s32.totalorder %s23, 1
      %p146 = por %p144, %p145
      %p147 = scmp.ne.s32.totalorder %s138, %s139
      %p148 = scmp.eq.s32.totalorder %s23, 0
      %p149 = por %p147, %p148
      %p150 = scmp.ne.s32.totalorder %s138, %s139
      %p151 = scmp.eq.s32.totalorder %s24, 1
      %p152 = por %p150, %p151
      %p154 = scmp.ne.s32.totalorder %s139, %s153
      %p155 = scmp.eq.s32.totalorder %s24, 0
      %p156 = por %p154, %p155
      %s157 = ssub.s32 %s18, %s25
      %p158 = scmp.eq.s32.totalorder %s157, 0
      %s160 = sadd.s32 %s159, 1
      %s161 = scalar_select %p158, %s159, %s160
      %p164 = pneg %p158
      %p165 = scmp.eq.s32.totalorder %s18, 1
      %p166 = por %p164, %p165
      %p167 = scmp.ne.s32.totalorder %s159, %s162
      %p168 = scmp.eq.s32.totalorder %s18, 0
      %p169 = por %p167, %p168
      %p170 = scmp.ne.s32.totalorder %s159, %s162
      %p171 = scmp.eq.s32.totalorder %s23, 1
      %p172 = por %p170, %p171
      %p173 = scmp.ne.s32.totalorder %s162, %s163
      %p174 = scmp.eq.s32.totalorder %s23, 0
      %p175 = por %p173, %p174
      %p176 = scmp.ne.s32.totalorder %s162, %s163
      %p177 = scmp.eq.s32.totalorder %s24, 1
      %p178 = por %p176, %p177
      %p180 = scmp.ne.s32.totalorder %s163, %s179
      %p181 = scmp.eq.s32.totalorder %s24, 0
      %p182 = por %p180, %p181
      %p183 = scmp.le.s32.totalorder 1, %s18
      %p184 = scmp.lt.s32.totalorder %s18, 3
      %p185 = pnand %p183, %p184
      %p186 = pneg %p185
      // Predicated region
      $region9: #{tpu_custom_call.1} parent=5 // pred_check
        _
      $region10: #{tpu_custom_call.1} parent=5 // pred_check_branch
        %188 = sbr.rel (%p185) target = $region12
      $region11: #{tpu_custom_call.1} parent=5 // pred_region
        %s189 = ssub.s32 %s18, 1
        // Predicated region
        $region13: #{tpu_custom_call.1} parent=11 // pred_check
          %p190 = pneg %p65
        $region14: #{tpu_custom_call.1} parent=11 // pred_check_branch
          %192 = sbr.rel (%p190) target = $region16
        $region15: #{tpu_custom_call.1} parent=11 // pred_region
          _
        $region16: #{tpu_custom_call.1} parent=11 // pred_fallthru
          _
        // Predicated region
        $region17: #{tpu_custom_call.1} parent=11 // pred_check
          %p193 = pneg %p86
        $region18: #{tpu_custom_call.1} parent=11 // pred_check_branch
          %195 = sbr.rel (%p193) target = $region20
        $region19: #{tpu_custom_call.1} parent=11 // pred_region
          _
        $region20: #{tpu_custom_call.1} parent=11 // pred_fallthru
          _
        // Predicated region
        $region21: #{tpu_custom_call.1} parent=11 // pred_check
          %p196 = pneg %p107
        $region22: #{tpu_custom_call.1} parent=11 // pred_check_branch
          %198 = sbr.rel (%p196) target = $region24
        $region23: #{tpu_custom_call.1} parent=11 // pred_region
          _
        $region24: #{tpu_custom_call.1} parent=11 // pred_fallthru
          _
        // Predicated region
        $region25: #{tpu_custom_call.1} parent=11 // pred_check
          %p199 = pneg %p128
        $region26: #{tpu_custom_call.1} parent=11 // pred_check_branch
          %201 = sbr.rel (%p199) target = $region28
        $region27: #{tpu_custom_call.1} parent=11 // pred_region
          _
        $region28: #{tpu_custom_call.1} parent=11 // pred_fallthru
          _
        // Predicated region
        $region29: #{tpu_custom_call.1} parent=11 // pred_check
          %p202 = pneg %p149
        $region30: #{tpu_custom_call.1} parent=11 // pred_check_branch
          %204 = sbr.rel (%p202) target = $region32
        $region31: #{tpu_custom_call.1} parent=11 // pred_region
          _
        $region32: #{tpu_custom_call.1} parent=11 // pred_fallthru
          _
      $region12: #{tpu_custom_call.1} parent=5 // pred_fallthru
        _
      %p205 = scmp.lt.s32.totalorder %s18, 2
      // Predicated region
      $region33: #{tpu_custom_call.1} parent=5 // pred_check
        %p206 = pneg %p205
      $region34: #{tpu_custom_call.1} parent=5 // pred_check_branch
        %208 = sbr.rel (%p206) target = $region36
      $region35: #{tpu_custom_call.1} parent=5 // pred_region
        // Predicated region
        $region37: #{tpu_custom_call.1} parent=35 // pred_check
          %p209 = pneg %p38
        $region38: #{tpu_custom_call.1} parent=35 // pred_check_branch
          %211 = sbr.rel (%p209) target = $region40
        $region39: #{tpu_custom_call.1} parent=35 // pred_region
          %s212 = sand.u32 %s28, 1
          %s213 = scalar_lea.sflag [#allocation3], %s212
          %s214 = sand.u32 %s28, 1
          %s215 = smul.addr %s214, 12
          %s216 = scalar_lea.vmem [#allocation2], %s215
          %218 = vsyncadd %s213, 0
          %s219 = smul.addr %s18, 3
          %s220 = smul.addr %s219, 4
          %s221 = scalar_lea.hbm %s0, %s220
          %s223 = sshll.u32 %s221, 4
          %s224 = int_to_ptr.hbm [resolvable:$true] %s223
          %s225 = sshll.u32 %s216, 4
          %s226 = int_to_ptr.vmem [resolvable:$true] %s225
          %228 = dma.hbm_to_vmem [thread:$0]  %s224, 192, %s226, %s213
        $region40: #{tpu_custom_call.1} parent=35 // pred_fallthru
          _
      $region36: #{tpu_custom_call.1} parent=5 // pred_fallthru
        _
      %p229 = scmp.le.s32.totalorder 1, %s18
      %p230 = scmp.lt.s32.totalorder %s18, 3
      %p231 = pnand %p229, %p230
      %p232 = pneg %p231
      // Predicated region
      $region41: #{tpu_custom_call.1} parent=5 // pred_check
        _
      $region42: #{tpu_custom_call.1} parent=5 // pred_check_branch
        %234 = sbr.rel (%p231) target = $region44
      $region43: #{tpu_custom_call.1} parent=5 // pred_region
        %s235 = ssub.s32 %s18, 1
        %s236 = sand.u32 %s31, 1
        %s237 = scalar_lea.sflag [#allocation3], %s236
        %s238 = sand.u32 %s31, 1
        %s239 = smul.addr %s238, 12
        %s240 = scalar_lea.vmem [#allocation2], %s239
        // Predicated region
        $region45: #{tpu_custom_call.1} parent=43 // pred_check
          %p241 = pneg %p44
        $region46: #{tpu_custom_call.1} parent=43 // pred_check_branch
          %243 = sbr.rel (%p241) target = $region48
        $region47: #{tpu_custom_call.1} parent=43 // pred_region
          %245 = dma.done %s237, 192
        $region48: #{tpu_custom_call.1} parent=43 // pred_fallthru
          _
        %s246 = sand.u32 %s31, 1
        %s247 = scalar_lea.sflag [#allocation3], %s246
        %s248 = sand.u32 %s31, 1
        %s249 = smul.addr %s248, 12
        %s250 = scalar_lea.vmem [#allocation2], %s249
        %p251 = pneg %p44
        %p252 = pneg %p41
        %p253 = pneg %p65
        %p254 = pneg %p62
        %p255 = pneg %p86
        %p256 = pneg %p83
        %p257 = pneg %p107
        %p258 = pneg %p104
        %p259 = pneg %p128
        %p260 = pneg %p125
        %p261 = pneg %p149
        %p262 = pneg %p146
        %p263 = pneg %p175
        %p264 = pneg %p172
        %s265 = sand.u32 %s162, 1
        %s266 = scalar_lea.sflag [#allocation4], %s265
        %s267 = sand.u32 %s162, 1
        %s268 = smul.addr %s267, 12
        %s269 = scalar_lea.vmem [#allocation5], %s268
        %v271 = vld [vmem:[%s240] sm:$0xff]
        %v272 = vld [vmem:[%s240 + $0x8] sm:$0xf]
        %v273 = vld [vmem:[%s5] sm:$0x7]
        %v276 = vunpack.c.l.b16 %v271
        %v277 = vunpack.c.h.b16 %v271
        %v278 = vunpack.c.l.b16 %v272
        %v279 = vpack.c.b16 %v276, %v276
        %v280 = vpack.c.b16 %v277, %v277
        %v281 = vpack.c.b16 %v278, %v278
        %282 = vrot.lane.b32.xlu0 %v279, 127
        %v283 = vpop.permute.xlu0 %282
        %284 = vrot.lane.b32.xlu0 %v280, 127
        %v285 = vpop.permute.xlu0 %284
        %286 = vrot.lane.b32.xlu0 %v281, 127
        %v287 = vpop.permute.xlu0 %286
        %vm288 = vcmask 1039360
        %v289 = vsel %vm288, %v283, %v285
        %v290 = vsel %vm288, %v285, %v287
        %vm291 = vcmask 547840
        %v294 = vsel %vm291, %v287, 0
        %295 = vrot.lane.b32.xlu0 %v279, 126
        %v296 = vpop.permute.xlu0 %295
        %297 = vrot.lane.b32.xlu0 %v280, 126
        %v298 = vpop.permute.xlu0 %297
        %299 = vrot.lane.b32.xlu0 %v281, 126
        %v300 = vpop.permute.xlu0 %299
        %vm301 = vcmask 1031168
        %v302 = vsel %vm301, %v296, %v298
        %v303 = vsel %vm301, %v298, %v300
        %vm304 = vcmask 539648
        %v306 = vsel %vm304, %v300, 0
        %307 = vrot.lane.b32.xlu0 %v279, 110
        %v308 = vpop.permute.xlu0 %307
        %309 = vrot.lane.b32.xlu0 %v280, 110
        %v310 = vpop.permute.xlu0 %309
        %311 = vrot.lane.b32.xlu0 %v281, 110
        %v312 = vpop.permute.xlu0 %311
        %vm313 = vcmask 900096
        %v314 = vsel %vm313, %v308, %v310
        %v315 = vsel %vm313, %v310, %v312
        %vm316 = vcmask 408576
        %v318 = vsel %vm316, %v312, 0
        %319 = vrot.lane.b32.xlu0 %v279, 109
        %v320 = vpop.permute.xlu0 %319
        %321 = vrot.lane.b32.xlu0 %v280, 109
        %v322 = vpop.permute.xlu0 %321
        %323 = vrot.lane.b32.xlu0 %v281, 109
        %v324 = vpop.permute.xlu0 %323
        %vm325 = vcmask 891904
        %v326 = vsel %vm325, %v320, %v322
        %v327 = vsel %vm325, %v322, %v324
        %vm328 = vcmask 400384
        %v330 = vsel %vm328, %v324, 0
        %331 = vrot.lane.b32.xlu0 %v279, 108
        %v332 = vpop.permute.xlu0 %331
        %333 = vrot.lane.b32.xlu0 %v280, 108
        %v334 = vpop.permute.xlu0 %333
        %335 = vrot.lane.b32.xlu0 %v281, 108
        %v336 = vpop.permute.xlu0 %335
        %vm337 = vcmask 883712
        %v338 = vsel %vm337, %v332, %v334
        %v339 = vsel %vm337, %v334, %v336
        %vm340 = vcmask 392192
        %v342 = vsel %vm340, %v336, 0
        %343 = vrot.lane.b32.xlu0 %v279, 92
        %v344 = vpop.permute.xlu0 %343
        %345 = vrot.lane.b32.xlu0 %v280, 92
        %v346 = vpop.permute.xlu0 %345
        %347 = vrot.lane.b32.xlu0 %v281, 92
        %v348 = vpop.permute.xlu0 %347
        %vm349 = vcmask 752640
        %v350 = vsel %vm349, %v344, %v346
        %v351 = vsel %vm349, %v346, %v348
        %vm352 = vcmask 261120
        %v354 = vsel %vm352, %v348, 0
        %355 = vrot.lane.b32.xlu0 %v279, 91
        %v356 = vpop.permute.xlu0 %355
        %357 = vrot.lane.b32.xlu0 %v280, 91
        %v358 = vpop.permute.xlu0 %357
        %359 = vrot.lane.b32.xlu0 %v281, 91
        %v360 = vpop.permute.xlu0 %359
        %vm361 = vcmask 744448
        %v362 = vsel %vm361, %v356, %v358
        %v363 = vsel %vm361, %v358, %v360
        %vm364 = vcmask 252928
        %v366 = vsel %vm364, %v360, 0
        %367 = vrot.lane.b32.xlu0 %v279, 90
        %v368 = vpop.permute.xlu0 %367
        %369 = vrot.lane.b32.xlu0 %v280, 90
        %v370 = vpop.permute.xlu0 %369
        %371 = vrot.lane.b32.xlu0 %v281, 90
        %v372 = vpop.permute.xlu0 %371
        %vm373 = vcmask 736256
        %v374 = vsel %vm373, %v368, %v370
        %v375 = vsel %vm373, %v370, %v372
        %vm376 = vcmask 244736
        %v378 = vsel %vm376, %v372, 0
        %v379 = vld [vmem:[%s1] sm:$0xf]
        %v381 = vrot.slane %v289, 4
        %v382 = vrot.slane %v290, 4
        %v383 = vrot.slane %v294, 4
        %v385 = vrot.slane %v314, 4
        %v386 = vrot.slane %v315, 4
        %v387 = vrot.slane %v318, 4
        %v389 = vrot.slane %v338, 4
        %v390 = vrot.slane %v339, 4
        %v391 = vrot.slane %v342, 4
        %v393 = vrot.slane %v362, 4
        %v394 = vrot.slane %v363, 4
        %v395 = vrot.slane %v366, 4
        %vm396 = vcmask 1043456
        %v399 = vsel %vm396, %v279, %v381
        %v403 = vsel %vm396, %v280, %v382
        %v407 = vsel %vm396, %v281, %v383
        %v411 = vsel %vm396, %v302, %v385
        %v415 = vsel %vm396, %v303, %v386
        %v418 = vsel %vm396, %v306, %v387
        %v422 = vsel %vm396, %v326, %v389
        %v426 = vsel %vm396, %v327, %v390
        %v429 = vsel %vm396, %v330, %v391
        %v433 = vsel %vm396, %v350, %v393
        %v437 = vsel %vm396, %v351, %v394
        %v440 = vsel %vm396, %v354, %v395
        %v442 = vld [vmem:[%s2] sm:$0xff]
        %444 = vset.pattern.permute.xlu0 0
        %445 = vperm.xlu0 %444, %v442
        %v446 = vpop.permute.xlu0 %445
        %vm448 = vcmask 588800
        %v450 = vsel %vm448, %v379, 0
        %v453 = vsel %vm396, %v374, 0
        %v456 = vsel %vm396, %v375, 0
        %v458 = vsel %vm396, %v378, 0
        %460 = vmatpush.bf16.msra.mxu0 0
        %461 = vmatpush.bf16.msra.mxu0 0
        %462 = vmatpush.bf16.msra.mxu0 0
        %463 = vmatpush.bf16.msra.mxu0 %v453
        %464 = vmatpush.bf16.msra.mxu0 %v433
        %465 = vmatpush.bf16.msra.mxu0 %v422
        %466 = vmatpush.bf16.msra.mxu0 %v411
        %467 = vmatpush.bf16.msra.mxu0 %v399
        %468 = vmatmul.bf16.gmra.mxu0 %v450
        %v469 = vpop.f32.mrf.mxu0
        %v470 = vadd.f32 %v446, %v469
        %v471 = vpop.f32.mrf.mxu0
        %472 = vdwg.mxu0
        %473 = vmatpush.bf16.msra.mxu0 0
        %474 = vmatpush.bf16.msra.mxu0 0
        %475 = vmatpush.bf16.msra.mxu0 0
        %476 = vmatpush.bf16.msra.mxu0 %v456
        %477 = vmatpush.bf16.msra.mxu0 %v437
        %478 = vmatpush.bf16.msra.mxu0 %v426
        %479 = vmatpush.bf16.msra.mxu0 %v415
        %480 = vmatpush.bf16.msra.mxu0 %v403
        %481 = vmatmul.bf16.gmra.mxu0 %v450
        %v482 = vpop.f32.mrf.mxu0
        %v483 = vadd.f32 %v446, %v482
        %v484 = vpop.f32.mrf.mxu0
        %485 = vdwg.mxu0
        %486 = vmatpush.bf16.msra.mxu0 0
        %487 = vmatpush.bf16.msra.mxu0 0
        %488 = vmatpush.bf16.msra.mxu0 0
        %489 = vmatpush.bf16.msra.mxu0 %v458
        %490 = vmatpush.bf16.msra.mxu0 %v440
        %491 = vmatpush.bf16.msra.mxu0 %v429
        %492 = vmatpush.bf16.msra.mxu0 %v418
        %493 = vmatpush.bf16.msra.mxu0 %v407
        %494 = vmatmul.bf16.gmra.mxu0 %v450
        %v495 = vpop.f32.mrf.mxu0
        %v496 = vadd.f32 %v446, %v495
        %v497 = vpop.f32.mrf.mxu0
        %498 = vdwg.mxu0
        %v499 = vmax.f32 %v470, 0.0
        %v500 = vmax.f32 %v483, 0.0
        %v501 = vmax.f32 %v496, 0.0
        %505 = vrot.lane.b32.xlu0 %v499, 19
        %v506 = vpop.permute.xlu0 %505
        %507 = vrot.lane.b32.xlu0 %v500, 19
        %v508 = vpop.permute.xlu0 %507
        %509 = vrot.lane.b32.xlu0 %v501, 19
        %v510 = vpop.permute.xlu0 %509
        %vm511 = vcmask 154624
        %v512 = vsel %vm511, %v506, %v508
        %v513 = vsel %vm511, %v508, %v510
        %v517 = vsel %vm511, 0.0, %v506
        %v519 = vperm.slane %v273, 0
        %v520 = vperm.slane %v273, 1
        %v521 = vperm.slane %v273, 2
        %v525 = vmul.f32 %v517, %v519
        %v526 = vmul.f32 %v512, %v520
        %v527 = vmul.f32 %v513, %v521
        %v528 = vpack.c.bf16 %v526, %v525
        %v529 = vpack.c.bf16 %v527, %v527
        %v532 = vunpack.c.l.b16 %v528
        %v533 = vunpack.c.h.b16 %v528
        %v534 = vunpack.c.l.b16 %v529
        %v535 = vpack.c.b16 %v532, %v532
        %v536 = vpack.c.b16 %v533, %v533
        %v537 = vpack.c.b16 %v534, %v534
        %538 = vrot.lane.b32.xlu0 %v535, 127
        %v539 = vpop.permute.xlu0 %538
        %540 = vrot.lane.b32.xlu0 %v536, 127
        %v541 = vpop.permute.xlu0 %540
        %542 = vrot.lane.b32.xlu0 %v537, 127
        %v543 = vpop.permute.xlu0 %542
        %v544 = vsel %vm288, %v539, %v541
        %v545 = vsel %vm288, %v541, %v543
        %v547 = vsel %vm291, %v543, 0
        %548 = vrot.lane.b32.xlu0 %v535, 126
        %v549 = vpop.permute.xlu0 %548
        %550 = vrot.lane.b32.xlu0 %v536, 126
        %v551 = vpop.permute.xlu0 %550
        %552 = vrot.lane.b32.xlu0 %v537, 126
        %v553 = vpop.permute.xlu0 %552
        %v554 = vsel %vm301, %v549, %v551
        %v555 = vsel %vm301, %v551, %v553
        %v557 = vsel %vm304, %v553, 0
        %558 = vrot.lane.b32.xlu0 %v535, 110
        %v559 = vpop.permute.xlu0 %558
        %560 = vrot.lane.b32.xlu0 %v536, 110
        %v561 = vpop.permute.xlu0 %560
        %562 = vrot.lane.b32.xlu0 %v537, 110
        %v563 = vpop.permute.xlu0 %562
        %v564 = vsel %vm313, %v559, %v561
        %v565 = vsel %vm313, %v561, %v563
        %v567 = vsel %vm316, %v563, 0
        %568 = vrot.lane.b32.xlu0 %v535, 109
        %v569 = vpop.permute.xlu0 %568
        %570 = vrot.lane.b32.xlu0 %v536, 109
        %v571 = vpop.permute.xlu0 %570
        %572 = vrot.lane.b32.xlu0 %v537, 109
        %v573 = vpop.permute.xlu0 %572
        %v574 = vsel %vm325, %v569, %v571
        %v575 = vsel %vm325, %v571, %v573
        %v577 = vsel %vm328, %v573, 0
        %578 = vrot.lane.b32.xlu0 %v535, 108
        %v579 = vpop.permute.xlu0 %578
        %580 = vrot.lane.b32.xlu0 %v536, 108
        %v581 = vpop.permute.xlu0 %580
        %582 = vrot.lane.b32.xlu0 %v537, 108
        %v583 = vpop.permute.xlu0 %582
        %v584 = vsel %vm337, %v579, %v581
        %v585 = vsel %vm337, %v581, %v583
        %v587 = vsel %vm340, %v583, 0
        %588 = vrot.lane.b32.xlu0 %v535, 92
        %v589 = vpop.permute.xlu0 %588
        %590 = vrot.lane.b32.xlu0 %v536, 92
        %v591 = vpop.permute.xlu0 %590
        %592 = vrot.lane.b32.xlu0 %v537, 92
        %v593 = vpop.permute.xlu0 %592
        %v594 = vsel %vm349, %v589, %v591
        %v595 = vsel %vm349, %v591, %v593
        %v597 = vsel %vm352, %v593, 0
        %598 = vrot.lane.b32.xlu0 %v535, 91
        %v599 = vpop.permute.xlu0 %598
        %600 = vrot.lane.b32.xlu0 %v536, 91
        %v601 = vpop.permute.xlu0 %600
        %602 = vrot.lane.b32.xlu0 %v537, 91
        %v603 = vpop.permute.xlu0 %602
        %v604 = vsel %vm361, %v599, %v601
        %v605 = vsel %vm361, %v601, %v603
        %v607 = vsel %vm364, %v603, 0
        %608 = vrot.lane.b32.xlu0 %v535, 90
        %v609 = vpop.permute.xlu0 %608
        %610 = vrot.lane.b32.xlu0 %v536, 90
        %v611 = vpop.permute.xlu0 %610
        %612 = vrot.lane.b32.xlu0 %v537, 90
        %v613 = vpop.permute.xlu0 %612
        %v614 = vsel %vm373, %v609, %v611
        %v615 = vsel %vm373, %v611, %v613
        %v617 = vsel %vm376, %v613, 0
        %v619 = vrot.slane %v544, 4
        %v620 = vrot.slane %v545, 4
        %v621 = vrot.slane %v547, 4
        %v623 = vrot.slane %v564, 4
        %v624 = vrot.slane %v565, 4
        %v625 = vrot.slane %v567, 4
        %v627 = vrot.slane %v584, 4
        %v628 = vrot.slane %v585, 4
        %v629 = vrot.slane %v587, 4
        %v631 = vrot.slane %v604, 4
        %v632 = vrot.slane %v605, 4
        %v633 = vrot.slane %v607, 4
        %v635 = vrot.slane %v326, 4
        %v636 = vrot.slane %v327, 4
        %v637 = vrot.slane %v330, 4
        %v640 = vsel %vm396, %v535, %v619
        %v644 = vsel %vm396, %v536, %v620
        %v648 = vsel %vm396, %v537, %v621
        %v652 = vsel %vm396, %v554, %v623
        %v656 = vsel %vm396, %v555, %v624
        %v659 = vsel %vm396, %v557, %v625
        %v663 = vsel %vm396, %v574, %v627
        %v667 = vsel %vm396, %v575, %v628
        %v670 = vsel %vm396, %v577, %v629
        %v674 = vsel %vm396, %v594, %v631
        %v678 = vsel %vm396, %v595, %v632
        %v681 = vsel %vm396, %v597, %v633
        %v685 = vsel %vm396, %v614, %v635
        %v689 = vsel %vm396, %v615, %v636
        %v692 = vsel %vm396, %v617, %v637
        %v694 = vld [vmem:[%s3] sm:$0xf]
        %v695 = vld [vmem:[%s4] sm:$0xff]
        %697 = vset.pattern.permute.xlu0 0
        %698 = vperm.xlu0 %697, %v695
        %v699 = vpop.permute.xlu0 %698
        %vm701 = vcmask 654336
        %v703 = vsel %vm701, %v694, 0
        %705 = vmatpush.bf16.msra.mxu0 0
        %706 = vmatpush.bf16.msra.mxu0 0
        %707 = vmatpush.bf16.msra.mxu0 0
        %708 = vmatpush.bf16.msra.mxu0 %v685
        %709 = vmatpush.bf16.msra.mxu0 %v674
        %710 = vmatpush.bf16.msra.mxu0 %v663
        %711 = vmatpush.bf16.msra.mxu0 %v652
        %712 = vmatpush.bf16.msra.mxu0 %v640
        %713 = vmatmul.bf16.gmra.mxu0 %v703
        %v714 = vpop.f32.mrf.mxu0
        %v715 = vadd.f32 %v699, %v714
        %v716 = vpop.f32.mrf.mxu0
        %717 = vdwg.mxu0
        %718 = vmatpush.bf16.msra.mxu0 0
        %719 = vmatpush.bf16.msra.mxu0 0
        %720 = vmatpush.bf16.msra.mxu0 0
        %721 = vmatpush.bf16.msra.mxu0 %v689
        %722 = vmatpush.bf16.msra.mxu0 %v678
        %723 = vmatpush.bf16.msra.mxu0 %v667
        %724 = vmatpush.bf16.msra.mxu0 %v656
        %725 = vmatpush.bf16.msra.mxu0 %v644
        %726 = vmatmul.bf16.gmra.mxu0 %v703
        %v727 = vpop.f32.mrf.mxu0
        %v728 = vadd.f32 %v699, %v727
        %v729 = vpop.f32.mrf.mxu0
        %730 = vdwg.mxu0
        %731 = vmatpush.bf16.msra.mxu0 0
        %732 = vmatpush.bf16.msra.mxu0 0
        %733 = vmatpush.bf16.msra.mxu0 0
        %734 = vmatpush.bf16.msra.mxu0 %v692
        %735 = vmatpush.bf16.msra.mxu0 %v681
        %736 = vmatpush.bf16.msra.mxu0 %v670
        %737 = vmatpush.bf16.msra.mxu0 %v659
        %738 = vmatpush.bf16.msra.mxu0 %v648
        %739 = vmatmul.bf16.gmra.mxu0 %v703
        %v740 = vpop.f32.mrf.mxu0
        %v741 = vadd.f32 %v699, %v740
        %v742 = vpop.f32.mrf.mxu0
        %743 = vdwg.mxu0
        %v744 = vmax.f32 %v715, 0.0
        %v745 = vmax.f32 %v728, 0.0
        %v746 = vmax.f32 %v741, 0.0
        %v747 = vpack.c.bf16 %v745, %v744
        %v748 = vpack.c.bf16 %v746, %v746
        %749 = vst [vmem:[%s269] sm:$0xff] %v747
        %vm750 = vcmask 551936
        %751 = vst.msk [vmem:[%s269 + $0x8] sm:$0xf] %vm750, %v748
        %s752 = sand.u32 %s162, 1
        %s753 = scalar_lea.sflag [#allocation4], %s752
        %s754 = sand.u32 %s162, 1
        %s755 = smul.addr %s754, 12
        %s756 = scalar_lea.vmem [#allocation5], %s755
        // Predicated region
        $region49: #{tpu_custom_call.1} parent=43 // pred_check
          %p757 = pneg %p172
        $region50: #{tpu_custom_call.1} parent=43 // pred_check_branch
          %759 = sbr.rel (%p757) target = $region52
        $region51: #{tpu_custom_call.1} parent=43 // pred_region
          %761 = vsyncadd %s753, 0
          %s762 = smul.addr %s23, 3
          %s763 = smul.addr %s762, 4
          %s764 = scalar_lea.hbm %s6, %s763
          %s766 = sshll.u32 %s756, 4
          %s767 = int_to_ptr.vmem [resolvable:$true] %s766
          %s768 = sshll.u32 %s764, 4
          %s769 = int_to_ptr.hbm [resolvable:$true] %s768
          %771 = dma.vmem_to_hbm [thread:$0]  %s767, 192, %s769, %s753
        $region52: #{tpu_custom_call.1} parent=43 // pred_fallthru
          _
      $region44: #{tpu_custom_call.1} parent=5 // pred_fallthru
        _
      %p772 = scmp.le.s32.totalorder 2, %s18
      // Predicated region
      $region53: #{tpu_custom_call.1} parent=5 // pred_check
        %p773 = pneg %p772
      $region54: #{tpu_custom_call.1} parent=5 // pred_check_branch
        %775 = sbr.rel (%p773) target = $region56
      $region55: #{tpu_custom_call.1} parent=5 // pred_region
        %s776 = ssub.s32 %s18, 2
        // Predicated region
        $region57: #{tpu_custom_call.1} parent=55 // pred_check
          %p777 = pneg %p178
        $region58: #{tpu_custom_call.1} parent=55 // pred_check_branch
          %779 = sbr.rel (%p777) target = $region60
        $region59: #{tpu_custom_call.1} parent=55 // pred_region
          %s780 = sand.u32 %s163, 1
          %s781 = scalar_lea.sflag [#allocation4], %s780
          %s782 = sand.u32 %s163, 1
          %s783 = smul.addr %s782, 12
          %s784 = scalar_lea.vmem [#allocation5], %s783
          %786 = dma.done %s781, 192
        $region60: #{tpu_custom_call.1} parent=55 // pred_fallthru
          _
      $region56: #{tpu_custom_call.1} parent=5 // pred_fallthru
        _
    $region6: #{tpu_custom_call.1} parent=1 // loop_footer
      %s22 = sadd.s32 1, %s18
    $region7: #{tpu_custom_call.1} parent=1 // loop_footer_branch
      %17 = sbr.rel target = $region3
    $region8: #{tpu_custom_call.1} parent=1 // loop_exit
      _
    %787 = vsyncpa [#allocation3], 1
    %s788 = scalar_lea.sflag [#allocation3], 1
    %789 = vsyncpa %s788, 1
    %790 = vsyncpa [#allocation4], 1
    %s791 = scalar_lea.sflag [#allocation4], 1
    %792 = vsyncpa %s791, 1

</llo_original>
